<compile_context>
chip_gen: v5e
topology: v5e:2x2
jax: 0.10.0
libtpu: 0.0.40
codegen_flags: <defaults>
</compile_context>

<pallas_src>
import functools

import jax
import jax.numpy as jnp
from jax.experimental import pallas as pl
from jax.experimental.pallas import tpu as pltpu


def _attention_kernel(x_ref, w1_ref, b1_ref, w2_ref, o_ref, *, seq_len):
    """One program handles Bt batch elements, flattened into the matmul M dim.

    x_ref : (Bt*T, C)   torch's reshape(B, T, C) rows (row-major), flattened over batch
    w1    : (C, H), b1 : (1, H), w2 : (H, F)
    o_ref : (Bt*T, F)   softmax over the T rows belonging to each batch element
    """
    T = seq_len
    Bt = o_ref.shape[0] // T

    # dense1 + tanh: one MXU matmul over all Bt*T rows (better systolic occupancy than
    # one T-row matmul per batch element).
    h = jnp.tanh(
        jnp.dot(x_ref[...], w1_ref[...], preferred_element_type=jnp.float32)
        + b1_ref[...]
    )
    # dense2. NOTE: the dense2 bias is omitted on purpose — it is constant along the
    # softmax (T) axis, so softmax(logits + b2) == softmax(logits) exactly.
    logits = jnp.dot(h, w2_ref[...], preferred_element_type=jnp.float32)  # (Bt*T, F)

    # Softmax over the T rows of each batch element. Bt is a tiny static number, so a
    # static unroll is cheap and avoids any in-kernel reshape/relayout.
    for b in range(Bt):
        lb = logits[b * T:(b + 1) * T, :]                   # (T, F)
        m = jnp.max(lb, axis=0, keepdims=True)              # (1, F)
        e = jnp.exp(lb - m)                                 # (T, F)
        s = jnp.sum(e, axis=0, keepdims=True)               # (1, F)
        # approx=False: keep exact 1e-5 parity with the reference (EUP vrcp would save
        # nothing measurable here anyway).
        p = e * pl.reciprocal(s, approx=False)
        o_ref[b * T:(b + 1) * T, :] = p.astype(o_ref.dtype)


def attention_forward(x, w1, b1, w2, b2=None, *, batch_blocks=1):
    """x: (B, C, T) float32. Returns softmax output of shape (B, T, F).

    batch_blocks: number of grid programs the batch is split over. Default 1 (one
    program — per-grid-step overhead dominates at these sizes on v5e/v6e). On v7x set
    batch_blocks=2 so the "parallel" axis can shard half the batch per TensorCore.
    """
    B, C, T = x.shape
    Cin, H = w1.shape
    Hw, F = w2.shape
    assert Cin == C and Hw == H
    assert B % batch_blocks == 0
    Bt = B // batch_blocks
    if batch_blocks > 1:
        assert (Bt * T) % 8 == 0, "per-program row block must be sublane-aligned"

    # torch's x.reshape(B, T, C) is a row-major reinterpretation (NOT a transpose);
    # flatten further to (B*T, C) so the whole batch feeds the MXU M dimension.
    x2 = jnp.reshape(x, (B * T, C))
    b1_2d = b1.reshape(1, H)
    # b2 is intentionally not passed to the kernel: it cancels under softmax over T.
    del b2

    kernel = functools.partial(_attention_kernel, seq_len=T)

    cost = pl.CostEstimate(
        flops=2 * B * T * (C * H + H * F),
        transcendentals=B * T * (H + F),            # tanh + exp
        bytes_accessed=4 * (B * T * C + C * H + H + H * F + B * T * F),
    )

    out = pl.pallas_call(
        kernel,
        out_shape=jax.ShapeDtypeStruct((B * T, F), x.dtype),
        grid_spec=pltpu.PrefetchScalarGridSpec(
            num_scalar_prefetch=0,
            grid=(batch_blocks,),
            in_specs=[
                pl.BlockSpec((Bt * T, C), lambda g: (g, 0)),   # activations per program
                # Constant index_maps: weights/bias are fetched once and stay resident
                # across grid steps (no per-step re-DMA, no extra double buffer traffic).
                pl.BlockSpec((C, H), lambda g: (0, 0)),        # w1 (full)
                pl.BlockSpec((1, H), lambda g: (0, 0)),        # b1
                pl.BlockSpec((H, F), lambda g: (0, 0)),        # w2 (full)
            ],
            out_specs=pl.BlockSpec((Bt * T, F), lambda g: (g, 0)),
        ),
        compiler_params=pltpu.CompilerParams(
            dimension_semantics=("parallel",)),
        cost_estimate=cost,
    )(x2, w1, b1_2d, w2)
    return out.reshape(B, T, F)


def reference_forward(x, w1, b1, w2, b2):
    B, C, T = x.shape
    xr = jnp.reshape(x, (B, T, C))
    h = jnp.tanh(xr @ w1 + b1)
    logits = h @ w2 + b2          # reference keeps b2; kernel drops it (cancels exactly)
    return jax.nn.softmax(logits, axis=1)


if __name__ == "__main__":
    # Small shapes consistent with the module:
    #   in_features = C = 40, hidden = int(40 // 1.25) = 32, out_features = F = 16
    #   x: (B=2, C=40, T=16)
    B, C, T = 2, 40, 16
    H = int(C // 1.25)   # 32
    F = 16

    key = jax.random.PRNGKey(0)
    kx, k1, k2, k3, k4 = jax.random.split(key, 5)

    x = jax.random.normal(kx, (B, C, T), dtype=jnp.float32)

    # Deterministic synthetic parameters (uniform, roughly torch Linear scale).
    lim1 = 1.0 / (C ** 0.5)
    lim2 = 1.0 / (H ** 0.5)
    w1 = jax.random.uniform(k1, (C, H), minval=-lim1, maxval=lim1, dtype=jnp.float32)
    b1 = jax.random.uniform(k2, (H,), minval=-lim1, maxval=lim1, dtype=jnp.float32)
    w2 = jax.random.uniform(k3, (H, F), minval=-lim2, maxval=lim2, dtype=jnp.float32)
    b2 = jax.random.uniform(k4, (F,), minval=-lim2, maxval=lim2, dtype=jnp.float32)

    out = attention_forward(x, w1, b1, w2, b2)        # default: single-program grid
    out = jax.block_until_ready(out)

    ref = reference_forward(x, w1, b1, w2, b2)
    assert out.shape == (B, T, F)
    assert jnp.allclose(out, ref, atol=2e-5, rtol=2e-5), "mismatch vs reference"
    # softmax over dim=1 sums to 1 per (batch, feature)
    assert jnp.allclose(jnp.sum(out, axis=1), 1.0, atol=1e-5)

    print("KERNEL_OK")
</pallas_src>

<mosaic_0001>
module attributes {stable_mosaic.version = 11 : i64} {
  func.func @_attention_kernel(%arg0: i32, %arg1: memref<32x40xf32, #tpu.memory_space<vmem>>, %arg2: memref<40x32xf32, #tpu.memory_space<vmem>>, %arg3: memref<1x32xf32, #tpu.memory_space<vmem>>, %arg4: memref<32x16xf32, #tpu.memory_space<vmem>>, %arg5: memref<32x16xf32, #tpu.memory_space<vmem>>) attributes {dimension_semantics = [#tpu.dimension_semantics<parallel>], iteration_bounds = array<i64: 1>, scalar_prefetch = 0 : i64, scratch_operands = 0 : i64, tpu.core_type = #tpu.core_type<tc>, window_params = [{transform_indices = @transform_0, window_bounds = array<i64: 32, 40>}, {pipeline_mode = #tpu.pipeline_mode<synchronous>, transform_indices = @transform_1, window_bounds = array<i64: 40, 32>}, {pipeline_mode = #tpu.pipeline_mode<synchronous>, transform_indices = @transform_2, window_bounds = array<i64: 1, 32>}, {pipeline_mode = #tpu.pipeline_mode<synchronous>, transform_indices = @transform_3, window_bounds = array<i64: 32, 16>}, {transform_indices = @transform_4, window_bounds = array<i64: 32, 16>}]} {
    %c0 = arith.constant 0 : index
    %c0_0 = arith.constant 0 : index
    %0 = vector.load %arg1[%c0, %c0_0] : memref<32x40xf32, #tpu.memory_space<vmem>>, vector<32x40xf32>
    %c0_1 = arith.constant 0 : index
    %c0_2 = arith.constant 0 : index
    %1 = vector.load %arg2[%c0_1, %c0_2] : memref<40x32xf32, #tpu.memory_space<vmem>>, vector<40x32xf32>
    %cst = arith.constant dense<0.000000e+00> : vector<32x32xf32>
    %2 = tpu.matmul %0, %1, %cst {dimension_numbers = #tpu.dot_dimension_numbers<[1], [0], [0], [1], [0, 0, 1, 1], [], []>} : vector<32x40xf32>, vector<40x32xf32>, vector<32x32xf32> -> vector<32x32xf32>
    %c0_3 = arith.constant 0 : index
    %c0_4 = arith.constant 0 : index
    %3 = vector.load %arg3[%c0_3, %c0_4] : memref<1x32xf32, #tpu.memory_space<vmem>>, vector<1x32xf32>
    %4 = vector.broadcast %3 : vector<1x32xf32> to vector<32x32xf32>
    %5 = arith.addf %2, %4 : vector<32x32xf32>
    %6 = math.tanh %5 : vector<32x32xf32>
    %c0_5 = arith.constant 0 : index
    %c0_6 = arith.constant 0 : index
    %7 = vector.load %arg4[%c0_5, %c0_6] : memref<32x16xf32, #tpu.memory_space<vmem>>, vector<32x16xf32>
    %cst_7 = arith.constant dense<0.000000e+00> : vector<32x16xf32>
    %8 = tpu.matmul %6, %7, %cst_7 {dimension_numbers = #tpu.dot_dimension_numbers<[1], [0], [0], [1], [0, 0, 1, 1], [], []>} : vector<32x32xf32>, vector<32x16xf32>, vector<32x16xf32> -> vector<32x16xf32>
    %9 = vector.extract_strided_slice %8 {offsets = [0, 0], sizes = [16, 16], strides = [1, 1]} : vector<32x16xf32> to vector<16x16xf32>
    %cst_8 = arith.constant dense<0xFF800000> : vector<16xf32>
    %10 = vector.multi_reduction <maximumf>, %9, %cst_8 [0] : vector<16x16xf32> to vector<16xf32>
    %11 = vector.shape_cast %10 : vector<16xf32> to vector<1x16xf32>
    %12 = vector.broadcast %11 : vector<1x16xf32> to vector<16x16xf32>
    %13 = arith.subf %9, %12 : vector<16x16xf32>
    %14 = math.exp %13 : vector<16x16xf32>
    %cst_9 = arith.constant dense<0.000000e+00> : vector<16xf32>
    %15 = vector.multi_reduction <add>, %14, %cst_9 [0] : vector<16x16xf32> to vector<16xf32>
    %16 = vector.shape_cast %15 : vector<16xf32> to vector<1x16xf32>
    %17 = tpu.reciprocal %16 : vector<1x16xf32> -> vector<1x16xf32>
    %18 = vector.broadcast %17 : vector<1x16xf32> to vector<16x16xf32>
    %19 = arith.mulf %14, %18 : vector<16x16xf32>
    %c0_10 = arith.constant 0 : index
    %c0_11 = arith.constant 0 : index
    %20 = vector.load %arg5[%c0_10, %c0_11] : memref<32x16xf32, #tpu.memory_space<vmem>>, vector<16x16xf32>
    tpu.vector_store %arg5[%c0_10, %c0_11], %19 {strides = array<i32>} : memref<32x16xf32, #tpu.memory_space<vmem>>, vector<16x16xf32>,
    %21 = vector.extract_strided_slice %8 {offsets = [16, 0], sizes = [16, 16], strides = [1, 1]} : vector<32x16xf32> to vector<16x16xf32>
    %cst_12 = arith.constant dense<0xFF800000> : vector<16xf32>
    %22 = vector.multi_reduction <maximumf>, %21, %cst_12 [0] : vector<16x16xf32> to vector<16xf32>
    %23 = vector.shape_cast %22 : vector<16xf32> to vector<1x16xf32>
    %24 = vector.broadcast %23 : vector<1x16xf32> to vector<16x16xf32>
    %25 = arith.subf %21, %24 : vector<16x16xf32>
    %26 = math.exp %25 : vector<16x16xf32>
    %cst_13 = arith.constant dense<0.000000e+00> : vector<16xf32>
    %27 = vector.multi_reduction <add>, %26, %cst_13 [0] : vector<16x16xf32> to vector<16xf32>
    %28 = vector.shape_cast %27 : vector<16xf32> to vector<1x16xf32>
    %29 = tpu.reciprocal %28 : vector<1x16xf32> -> vector<1x16xf32>
    %30 = vector.broadcast %29 : vector<1x16xf32> to vector<16x16xf32>
    %31 = arith.mulf %26, %30 : vector<16x16xf32>
    %c16 = arith.constant 16 : index
    %c0_14 = arith.constant 0 : index
    %32 = vector.load %arg5[%c16, %c0_14] : memref<32x16xf32, #tpu.memory_space<vmem>>, vector<16x16xf32>
    tpu.vector_store %arg5[%c16, %c0_14], %31 {strides = array<i32>} : memref<32x16xf32, #tpu.memory_space<vmem>>, vector<16x16xf32>,
    return
  }
  func.func @transform_0(%arg0: i32) -> (i32, i32) {
    %c0_i32 = arith.constant 0 : i32
    %c0_i32_0 = arith.constant 0 : i32
    return %arg0, %c0_i32 : i32, i32
  }
  func.func @transform_1(%arg0: i32) -> (i32, i32) {
    %c0_i32 = arith.constant 0 : i32
    %c0_i32_0 = arith.constant 0 : i32
    %c0_i32_1 = arith.constant 0 : i32
    return %c0_i32, %c0_i32_0 : i32, i32
  }
  func.func @transform_2(%arg0: i32) -> (i32, i32) {
    %c0_i32 = arith.constant 0 : i32
    %c0_i32_0 = arith.constant 0 : i32
    %c0_i32_1 = arith.constant 0 : i32
    return %c0_i32, %c0_i32_0 : i32, i32
  }
  func.func @transform_3(%arg0: i32) -> (i32, i32) {
    %c0_i32 = arith.constant 0 : i32
    %c0_i32_0 = arith.constant 0 : i32
    %c0_i32_1 = arith.constant 0 : i32
    return %c0_i32, %c0_i32_0 : i32, i32
  }
  func.func @transform_4(%arg0: i32) -> (i32, i32) {
    %c0_i32 = arith.constant 0 : i32
    %c0_i32_0 = arith.constant 0 : i32
    return %arg0, %c0_i32 : i32, i32
  }
}

</mosaic_0001>

<llo_original>
// kernel: tpu_custom_call.1
$region0: #{tpu_custom_call.1}
  #allocation0 [shape = 'u32[]', space=smem, size = 0x4, offset = 0x4, fixed_abs, tag = 'smem constant byte address 0x4 - core index']
  #allocation1 [shape = 'u32[72,128]{1,0:T(1,128)}', space=vmem, size = 0x9000, scoped, tag = 'internal scratch']
  %s0 = inlined_call_operand.vmem [shape: f32[32,40], index: 0, kind: input, shape index: {}]
  %s1 = inlined_call_operand.vmem [shape: f32[40,32], index: 1, kind: input, shape index: {}]
  %s2 = inlined_call_operand.vmem [shape: f32[1,32], index: 2, kind: input, shape index: {}]
  %s3 = inlined_call_operand.vmem [shape: f32[32,16], index: 3, kind: input, shape index: {}]
  %s4 = inlined_call_operand.vmem [shape: f32[32,16], index: 4, kind: output, shape index: {}]
  %s5 = sld [smem:[#allocation0]]
  $region26: #{tpu_custom_call.1} parent=0
    _
  %s7 = ssub.s32 1, %s5
  %s8 = scalar_select 0, %s7, %s5
  // Predicated region
  $region2: #{tpu_custom_call.1} parent=0 // pred_check
    _
  $region3: #{tpu_custom_call.1} parent=0 // pred_check_branch
    %10 = sbr.rel (0) target = $region5
  $region4: #{tpu_custom_call.1} parent=0 // pred_region
    _
  $region5: #{tpu_custom_call.1} parent=0 // pred_fallthru
    _
  // Predicated region
  $region6: #{tpu_custom_call.1} parent=0 // pred_check
    _
  $region7: #{tpu_custom_call.1} parent=0 // pred_check_branch
    %12 = sbr.rel (0) target = $region9
  $region8: #{tpu_custom_call.1} parent=0 // pred_region
    _
  $region9: #{tpu_custom_call.1} parent=0 // pred_fallthru
    _
  // Predicated region
  $region10: #{tpu_custom_call.1} parent=0 // pred_check
    _
  $region11: #{tpu_custom_call.1} parent=0 // pred_check_branch
    %14 = sbr.rel (0) target = $region13
  $region12: #{tpu_custom_call.1} parent=0 // pred_region
    _
  $region13: #{tpu_custom_call.1} parent=0 // pred_fallthru
    _
  // Predicated region
  $region14: #{tpu_custom_call.1} parent=0 // pred_check
    _
  $region15: #{tpu_custom_call.1} parent=0 // pred_check_branch
    %16 = sbr.rel (0) target = $region17
  $region16: #{tpu_custom_call.1} parent=0 // pred_region
    _
  $region17: #{tpu_custom_call.1} parent=0 // pred_fallthru
    _
  %v17 = vld [vmem:[%s0] sm:$0xff]
  %v18 = vld [vmem:[%s0 + $0x8] sm:$0xff]
  %v19 = vld [vmem:[%s0 + $0x10] sm:$0xff]
  %v20 = vld [vmem:[%s0 + $0x18] sm:$0xff]
  %v21 = vld [vmem:[%s1] sm:$0xff]
  %v22 = vld [vmem:[%s1 + $0x8] sm:$0xff]
  %v23 = vld [vmem:[%s1 + $0x10] sm:$0xff]
  %v24 = vld [vmem:[%s1 + $0x18] sm:$0xff]
  %v25 = vld [vmem:[%s1 + $0x20] sm:$0xff]
  %v26 = vld [vmem:[%s2] sm:$0x1]
  %v28 = vperm.slane %v26, 0
  %vm30 = vcmask 326656
  %v32 = vsel %vm30, %v17, 0
  %v35 = vsel %vm30, %v18, 0
  %v38 = vsel %vm30, %v19, 0
  %v41 = vsel %vm30, %v20, 0
  %43 = vmatpush.msra.mxu0 0.0
  %44 = vmatpush.msra.mxu0 0.0
  %45 = vmatpush.msra.mxu0 0.0
  %46 = vmatpush.msra.mxu0 0.0
  %47 = vmatpush.msra.mxu0 0.0
  %48 = vmatpush.msra.mxu0 0.0
  %49 = vmatpush.msra.mxu0 0.0
  %50 = vmatpush.msra.mxu0 0.0
  %51 = vmatpush.msra.mxu0 0.0
  %52 = vmatpush.msra.mxu0 0.0
  %53 = vmatpush.msra.mxu0 0.0
  %54 = vmatpush.msra.mxu0 %v25
  %55 = vmatpush.msra.mxu0 %v24
  %56 = vmatpush.msra.mxu0 %v23
  %57 = vmatpush.msra.mxu0 %v22
  %58 = vmatpush.msra.mxu0 %v21
  %59 = vmatmul.f32.gmra.mxu0 %v32
  %v60 = vpop.f32.mrf.mxu0
  %v61 = vadd.f32 %v28, %v60
  %62 = vmatmul.f32.gmra.mxu0 %v35
  %v63 = vpop.f32.mrf.mxu0
  %v64 = vadd.f32 %v28, %v63
  %65 = vmatmul.f32.gmra.mxu0 %v38
  %v66 = vpop.f32.mrf.mxu0
  %v67 = vadd.f32 %v28, %v66
  %68 = vmatmul.f32.gmra.mxu0 %v41
  %v69 = vpop.f32.mrf.mxu0
  %v70 = vadd.f32 %v28, %v69
  %71 = vdwg.mxu0
  %v72 = vtanh.pop %v61
  %v73 = vtanh.pop %v64
  %v74 = vtanh.pop %v67
  %v75 = vtanh.pop %v70
  %v76 = vld [vmem:[%s3] sm:$0xff]
  %v77 = vld [vmem:[%s3 + $0x8] sm:$0xff]
  %v78 = vld [vmem:[%s3 + $0x10] sm:$0xff]
  %v79 = vld [vmem:[%s3 + $0x18] sm:$0xff]
  %vm80 = vcmask 261120
  %v82 = vsel %vm80, %v72, 0
  %v85 = vsel %vm80, %v73, 0
  %v88 = vsel %vm80, %v74, 0
  %v91 = vsel %vm80, %v75, 0
  %93 = vmatpush.msra.mxu0 0.0
  %94 = vmatpush.msra.mxu0 0.0
  %95 = vmatpush.msra.mxu0 0.0
  %96 = vmatpush.msra.mxu0 0.0
  %97 = vmatpush.msra.mxu0 0.0
  %98 = vmatpush.msra.mxu0 0.0
  %99 = vmatpush.msra.mxu0 0.0
  %100 = vmatpush.msra.mxu0 0.0
  %101 = vmatpush.msra.mxu0 0.0
  %102 = vmatpush.msra.mxu0 0.0
  %103 = vmatpush.msra.mxu0 0.0
  %104 = vmatpush.msra.mxu0 0.0
  %105 = vmatpush.msra.mxu0 %v79
  %106 = vmatpush.msra.mxu0 %v78
  %107 = vmatpush.msra.mxu0 %v77
  %108 = vmatpush.msra.mxu0 %v76
  %109 = vmatmul.f32.gmra.mxu0 %v82
  %v110 = vpop.f32.mrf.mxu0
  %v111 = vadd.f32 0.0, %v110
  %112 = vmatmul.f32.gmra.mxu0 %v85
  %v113 = vpop.f32.mrf.mxu0
  %v114 = vadd.f32 0.0, %v113
  %115 = vmatmul.f32.gmra.mxu0 %v88
  %v116 = vpop.f32.mrf.mxu0
  %v117 = vadd.f32 0.0, %v116
  %118 = vmatmul.f32.gmra.mxu0 %v91
  %v119 = vpop.f32.mrf.mxu0
  %v120 = vadd.f32 0.0, %v119
  %121 = vdwg.mxu0
  %vm122 = vcmask 130048
  %v123 = vsel %vm122, %v111, -inf
  %v124 = vsel %vm122, %v114, -inf
  %v125 = vmax.f32 %v123, %v124
  %v126 = vrot.slane %v125, 4
  %v127 = vmax.f32 %v125, %v126
  %v128 = vrot.slane %v127, 2
  %v129 = vmax.f32 %v127, %v128
  %v130 = vrot.slane %v129, 1
  %v131 = vmax.f32 %v129, %v130
  %v132 = vsub.f32 %v111, %v131
  %v133 = vsub.f32 %v114, %v131
  %v134 = vmul.f32 %v132, 1.442695
  %v135 = vpow.pop %v134
  %v136 = vmul.f32 %v133, 1.442695
  %v137 = vpow.pop %v136
  %v138 = vsel %vm122, %v135, 0.0
  %v139 = vsel %vm122, %v137, 0.0
  %v140 = vadd.f32 %v138, %v139
  %v141 = vrot.slane %v140, 4
  %v142 = vadd.f32 %v140, %v141
  %v143 = vrot.slane %v142, 2
  %v144 = vadd.f32 %v142, %v143
  %v145 = vrot.slane %v144, 1
  %v146 = vadd.f32 %v144, %v145
  %v147 = vrcp.pop %v146
  %v148 = vmul.f32 %v146, %v147
  %v149 = vsub.f32 1.0, %v148
  %v150 = vmul.f32 %v147, %v149
  %v151 = vadd.f32 %v147, %v150
  %vm152 = vweird.f32 %v146
  %vm153 = vweird.f32 %v147
  %vm154 = vmor %vm152, %vm153
  %v155 = vsel %vm154, %v147, %v151
  %v156 = vand.u32 2147483647, %v146
  %vm157 = vcmp.eq.f32.partialorder %v156, 8.507059e+37
  %v158 = vand.u32 %v146, 2147483648
  %v159 = vor.u32 1.1754944e-38, %v158
  %v160 = vsel %vm157, %v159, %v155
  %v161 = vmul.f32 %v135, %v160
  %v162 = vmul.f32 %v137, %v160
  %163 = vst.msk [vmem:[%s4] sm:$0xff] %vm122, %v161
  %164 = vst.msk [vmem:[%s4 + $0x8] sm:$0xff] %vm122, %v162
  %v165 = vsel %vm122, %v117, -inf
  %v166 = vsel %vm122, %v120, -inf
  %v167 = vmax.f32 %v165, %v166
  %v168 = vrot.slane %v167, 4
  %v169 = vmax.f32 %v167, %v168
  %v170 = vrot.slane %v169, 2
  %v171 = vmax.f32 %v169, %v170
  %v172 = vrot.slane %v171, 1
  %v173 = vmax.f32 %v171, %v172
  %v174 = vsub.f32 %v117, %v173
  %v175 = vsub.f32 %v120, %v173
  %v176 = vmul.f32 %v174, 1.442695
  %v177 = vpow.pop %v176
  %v178 = vmul.f32 %v175, 1.442695
  %v179 = vpow.pop %v178
  %v180 = vsel %vm122, %v177, 0.0
  %v181 = vsel %vm122, %v179, 0.0
  %v182 = vadd.f32 %v180, %v181
  %v183 = vrot.slane %v182, 4
  %v184 = vadd.f32 %v182, %v183
  %v185 = vrot.slane %v184, 2
  %v186 = vadd.f32 %v184, %v185
  %v187 = vrot.slane %v186, 1
  %v188 = vadd.f32 %v186, %v187
  %v189 = vrcp.pop %v188
  %v190 = vmul.f32 %v188, %v189
  %v191 = vsub.f32 1.0, %v190
  %v192 = vmul.f32 %v189, %v191
  %v193 = vadd.f32 %v189, %v192
  %vm194 = vweird.f32 %v188
  %vm195 = vweird.f32 %v189
  %vm196 = vmor %vm194, %vm195
  %v197 = vsel %vm196, %v189, %v193
  %v198 = vand.u32 2147483647, %v188
  %vm199 = vcmp.eq.f32.partialorder %v198, 8.507059e+37
  %v200 = vand.u32 %v188, 2147483648
  %v201 = vor.u32 1.1754944e-38, %v200
  %v202 = vsel %vm199, %v201, %v197
  %v203 = vmul.f32 %v177, %v202
  %v204 = vmul.f32 %v179, %v202
  %205 = vst.msk [vmem:[%s4 + $0x10] sm:$0xff] %vm122, %v203
  %206 = vst.msk [vmem:[%s4 + $0x18] sm:$0xff] %vm122, %v204
  // Predicated region
  $region18: #{tpu_custom_call.1} parent=0 // pred_check
    _
  $region19: #{tpu_custom_call.1} parent=0 // pred_check_branch
    %208 = sbr.rel (0) target = $region21
  $region20: #{tpu_custom_call.1} parent=0 // pred_region
    _
  $region21: #{tpu_custom_call.1} parent=0 // pred_fallthru
    _
  // Predicated region
  $region22: #{tpu_custom_call.1} parent=0 // pred_check
    _
  $region23: #{tpu_custom_call.1} parent=0 // pred_check_branch
    %210 = sbr.rel (0) target = $region25
  $region24: #{tpu_custom_call.1} parent=0 // pred_region
    _
  $region25: #{tpu_custom_call.1} parent=0 // pred_fallthru
    _

</llo_original>
